<compile_context>
chip_gen: v5e
topology: v5e:2x2
jax: 0.10.0
libtpu: 0.0.40
codegen_flags: <defaults>
</compile_context>

<pallas_src>
import jax
import jax.numpy as jnp
from jax import lax
from jax.experimental import pallas as pl
from jax.experimental.pallas import tpu as pltpu

_K = 3  # kernel_size
_S = 3  # stride
_P = 1  # padding


def _maxpool3x3_s3_kernel(x_ref, o_ref):
    # x_ref block: (hob, 3, 3, WO, NC)   o_ref block: (hob, WO, NC)
    acc = x_ref[:, 0, 0, :, :]
    for dh in range(_K):
        for dw in range(_K):
            if dh == 0 and dw == 0:
                continue
            acc = jnp.maximum(acc, x_ref[:, dh, dw, :, :])
    o_ref[...] = acc


def max_pool2d_k3_s3_p1(x):
    """x: (N, C, H, W) float32 -> (N, C, HO, WO) float32 (PyTorch MaxPool2d(3,3,1))."""
    N, C, H, W = x.shape
    NC = N * C
    HO = (H + 2 * _P - _K) // _S + 1
    WO = (W + 2 * _P - _K) // _S + 1
    # Rows / cols of the input actually covered by some pooling window.
    HU = min(H, _S * HO - _P)
    WU = min(W, _S * WO - _P)

    neg_inf = jnp.array(-jnp.inf, dtype=x.dtype)

    # ---- layout plumbing (XLA): channels-last + -inf spatial padding -------
    x_cl = jnp.transpose(x.reshape(NC, H, W), (1, 2, 0))[:HU, :WU, :]   # (HU, WU, NC)
    x_pad = jnp.pad(
        x_cl,
        ((_P, _S * HO - _P - HU), (_P, _S * WO - _P - WU), (0, 0)),
        constant_values=neg_inf,
    )                                                                   # (3*HO, 3*WO, NC)
    # Expose the 3x3 window taps as leading axes -> (HO, 3, 3, WO, NC).
    x_win = x_pad.reshape(HO, _S, WO, _S, NC).transpose(0, 1, 3, 2, 4)

    # ---- block sizing: strip the output-row axis, keep everything else full.
    # Keep the double-buffered working set comfortably under the smallest
    # scoped-VMEM default; blocks are independent (stride == kernel) so no
    # halo rows are needed.
    itemsize = jnp.dtype(x.dtype).itemsize
    row_bytes = (_K * _K * WO * NC + WO * NC) * itemsize
    hob = max(1, min(HO, (3 * 1024 * 1024) // max(row_bytes, 1)))
    while HO % hob:          # make the grid divide evenly
        hob -= 1

    # TODO(synk): for very large N*C, additionally block the channel (lane)
    # axis in multiples of 128 instead of keeping it whole.
    out_cl = pl.pallas_call(
        _maxpool3x3_s3_kernel,
        out_shape=jax.ShapeDtypeStruct((HO, WO, NC), x.dtype),
        grid=(HO // hob,),
        in_specs=[pl.BlockSpec((hob, _K, _K, WO, NC),
                               lambda i: (i, 0, 0, 0, 0))],
        out_specs=pl.BlockSpec((hob, WO, NC), lambda i: (i, 0, 0)),
        compiler_params=pltpu.CompilerParams(
            dimension_semantics=("parallel",),
            vmem_limit_bytes=32 * 1024 * 1024,
        ),
    )(x_win)

    # Back to NCHW.
    return jnp.transpose(out_cl, (2, 0, 1)).reshape(N, C, HO, WO)


def _reference(x):
    """Pure-JAX/XLA reference: reduce_window max pool, kernel 3, stride 3, pad 1."""
    return lax.reduce_window(
        x,
        -jnp.inf,
        lax.max,
        window_dimensions=(1, 1, _K, _K),
        window_strides=(1, 1, _S, _S),
        padding=((0, 0), (0, 0), (_P, _P), (_P, _P)),
    )


if __name__ == "__main__":
    key = jax.random.PRNGKey(0)
    # Spatial dim 16 is not divisible by the stride of 3 (the point of the
    # original torch-mlir test module name).
    x = jax.random.normal(key, (2, 4, 16, 16), dtype=jnp.float32)

    out = max_pool2d_k3_s3_p1(x)
    out = jax.block_until_ready(out)

    ref = _reference(x)
    assert out.shape == (2, 4, 6, 6), out.shape
    assert ref.shape == out.shape, (ref.shape, out.shape)
    assert jnp.allclose(out, ref), "mismatch vs reduce_window reference"

    print("KERNEL_OK")
</pallas_src>

<mosaic_0001>
module attributes {stable_mosaic.version = 11 : i64} {
  func.func @_maxpool3x3_s3_kernel(%arg0: i32, %arg1: memref<6x3x3x6x8xf32, #tpu.memory_space<vmem>>, %arg2: memref<6x6x8xf32, #tpu.memory_space<vmem>>) attributes {dimension_semantics = [#tpu.dimension_semantics<parallel>], iteration_bounds = array<i64: 1>, scalar_prefetch = 0 : i64, scratch_operands = 0 : i64, tpu.core_type = #tpu.core_type<tc>, window_params = [{transform_indices = @transform_0, window_bounds = array<i64: 6, 3, 3, 6, 8>}, {transform_indices = @transform_1, window_bounds = array<i64: 6, 6, 8>}]} {
    %c0 = arith.constant 0 : index
    %c0_0 = arith.constant 0 : index
    %c0_1 = arith.constant 0 : index
    %c0_2 = arith.constant 0 : index
    %c0_3 = arith.constant 0 : index
    %0 = vector.load %arg1[%c0, %c0_0, %c0_1, %c0_2, %c0_3] : memref<6x3x3x6x8xf32, #tpu.memory_space<vmem>>, vector<6x1x1x6x8xf32>
    %1 = vector.shape_cast %0 : vector<6x1x1x6x8xf32> to vector<6x6x8xf32>
    %c0_4 = arith.constant 0 : index
    %c0_5 = arith.constant 0 : index
    %c1 = arith.constant 1 : index
    %c0_6 = arith.constant 0 : index
    %c0_7 = arith.constant 0 : index
    %2 = vector.load %arg1[%c0_4, %c0_5, %c1, %c0_6, %c0_7] : memref<6x3x3x6x8xf32, #tpu.memory_space<vmem>>, vector<6x1x1x6x8xf32>
    %3 = vector.shape_cast %2 : vector<6x1x1x6x8xf32> to vector<6x6x8xf32>
    %4 = arith.maximumf %1, %3 : vector<6x6x8xf32>
    %c0_8 = arith.constant 0 : index
    %c0_9 = arith.constant 0 : index
    %c2 = arith.constant 2 : index
    %c0_10 = arith.constant 0 : index
    %c0_11 = arith.constant 0 : index
    %5 = vector.load %arg1[%c0_8, %c0_9, %c2, %c0_10, %c0_11] : memref<6x3x3x6x8xf32, #tpu.memory_space<vmem>>, vector<6x1x1x6x8xf32>
    %6 = vector.shape_cast %5 : vector<6x1x1x6x8xf32> to vector<6x6x8xf32>
    %7 = arith.maximumf %4, %6 : vector<6x6x8xf32>
    %c0_12 = arith.constant 0 : index
    %c1_13 = arith.constant 1 : index
    %c0_14 = arith.constant 0 : index
    %c0_15 = arith.constant 0 : index
    %c0_16 = arith.constant 0 : index
    %8 = vector.load %arg1[%c0_12, %c1_13, %c0_14, %c0_15, %c0_16] : memref<6x3x3x6x8xf32, #tpu.memory_space<vmem>>, vector<6x1x1x6x8xf32>
    %9 = vector.shape_cast %8 : vector<6x1x1x6x8xf32> to vector<6x6x8xf32>
    %10 = arith.maximumf %7, %9 : vector<6x6x8xf32>
    %c0_17 = arith.constant 0 : index
    %c1_18 = arith.constant 1 : index
    %c1_19 = arith.constant 1 : index
    %c0_20 = arith.constant 0 : index
    %c0_21 = arith.constant 0 : index
    %11 = vector.load %arg1[%c0_17, %c1_18, %c1_19, %c0_20, %c0_21] : memref<6x3x3x6x8xf32, #tpu.memory_space<vmem>>, vector<6x1x1x6x8xf32>
    %12 = vector.shape_cast %11 : vector<6x1x1x6x8xf32> to vector<6x6x8xf32>
    %13 = arith.maximumf %10, %12 : vector<6x6x8xf32>
    %c0_22 = arith.constant 0 : index
    %c1_23 = arith.constant 1 : index
    %c2_24 = arith.constant 2 : index
    %c0_25 = arith.constant 0 : index
    %c0_26 = arith.constant 0 : index
    %14 = vector.load %arg1[%c0_22, %c1_23, %c2_24, %c0_25, %c0_26] : memref<6x3x3x6x8xf32, #tpu.memory_space<vmem>>, vector<6x1x1x6x8xf32>
    %15 = vector.shape_cast %14 : vector<6x1x1x6x8xf32> to vector<6x6x8xf32>
    %16 = arith.maximumf %13, %15 : vector<6x6x8xf32>
    %c0_27 = arith.constant 0 : index
    %c2_28 = arith.constant 2 : index
    %c0_29 = arith.constant 0 : index
    %c0_30 = arith.constant 0 : index
    %c0_31 = arith.constant 0 : index
    %17 = vector.load %arg1[%c0_27, %c2_28, %c0_29, %c0_30, %c0_31] : memref<6x3x3x6x8xf32, #tpu.memory_space<vmem>>, vector<6x1x1x6x8xf32>
    %18 = vector.shape_cast %17 : vector<6x1x1x6x8xf32> to vector<6x6x8xf32>
    %19 = arith.maximumf %16, %18 : vector<6x6x8xf32>
    %c0_32 = arith.constant 0 : index
    %c2_33 = arith.constant 2 : index
    %c1_34 = arith.constant 1 : index
    %c0_35 = arith.constant 0 : index
    %c0_36 = arith.constant 0 : index
    %20 = vector.load %arg1[%c0_32, %c2_33, %c1_34, %c0_35, %c0_36] : memref<6x3x3x6x8xf32, #tpu.memory_space<vmem>>, vector<6x1x1x6x8xf32>
    %21 = vector.shape_cast %20 : vector<6x1x1x6x8xf32> to vector<6x6x8xf32>
    %22 = arith.maximumf %19, %21 : vector<6x6x8xf32>
    %c0_37 = arith.constant 0 : index
    %c2_38 = arith.constant 2 : index
    %c2_39 = arith.constant 2 : index
    %c0_40 = arith.constant 0 : index
    %c0_41 = arith.constant 0 : index
    %23 = vector.load %arg1[%c0_37, %c2_38, %c2_39, %c0_40, %c0_41] : memref<6x3x3x6x8xf32, #tpu.memory_space<vmem>>, vector<6x1x1x6x8xf32>
    %24 = vector.shape_cast %23 : vector<6x1x1x6x8xf32> to vector<6x6x8xf32>
    %25 = arith.maximumf %22, %24 : vector<6x6x8xf32>
    %c0_42 = arith.constant 0 : index
    %c0_43 = arith.constant 0 : index
    %c0_44 = arith.constant 0 : index
    %26 = vector.load %arg2[%c0_42, %c0_43, %c0_44] : memref<6x6x8xf32, #tpu.memory_space<vmem>>, vector<6x6x8xf32>
    tpu.vector_store %arg2[%c0_42, %c0_43, %c0_44], %25 {strides = array<i32>} : memref<6x6x8xf32, #tpu.memory_space<vmem>>, vector<6x6x8xf32>,
    return
  }
  func.func @transform_0(%arg0: i32) -> (i32, i32, i32, i32, i32) {
    %c0_i32 = arith.constant 0 : i32
    %c0_i32_0 = arith.constant 0 : i32
    %c0_i32_1 = arith.constant 0 : i32
    %c0_i32_2 = arith.constant 0 : i32
    %c0_i32_3 = arith.constant 0 : i32
    return %arg0, %c0_i32, %c0_i32_0, %c0_i32_1, %c0_i32_2 : i32, i32, i32, i32, i32
  }
  func.func @transform_1(%arg0: i32) -> (i32, i32, i32) {
    %c0_i32 = arith.constant 0 : i32
    %c0_i32_0 = arith.constant 0 : i32
    %c0_i32_1 = arith.constant 0 : i32
    return %arg0, %c0_i32, %c0_i32_0 : i32, i32, i32
  }
}

</mosaic_0001>

<llo_original>
// kernel: tpu_custom_call.1
$region0: #{tpu_custom_call.1}
  #allocation0 [shape = 'u32[]', space=smem, size = 0x4, offset = 0x4, fixed_abs, tag = 'smem constant byte address 0x4 - core index']
  #allocation1 [shape = 'u32[72,128]{1,0:T(1,128)}', space=vmem, size = 0x9000, scoped, tag = 'internal scratch']
  %s0 = inlined_call_operand.hbm [shape: f32[6,3,3,6,8], index: 0, kind: input, shape index: {}]
  %s1 = inlined_call_operand.hbm [shape: f32[6,6,8], index: 1, kind: output, shape index: {}]
  %s2 = sld [smem:[#allocation0]]
  $region18: #{tpu_custom_call.1} parent=0
    _
  %s4 = ssub.s32 1, %s2
  %s5 = scalar_select 0, %s4, %s2
  $region1: #{tpu_custom_call.1} parent=0
    #allocation2 [shape = 'u8[221184]{0}', space=vmem, size = 0x36000, scoped, tag = 'input window, operand 0, single buffered']
    #allocation3 [shape = 's32[1]{0}', space=sflag, size = 0x4, scoped, tag = 'scoped memory for tpu_custom_call.1']
    #allocation4 [shape = 's32[1]{0}', space=sflag, size = 0x4, scoped, tag = 'scoped memory for tpu_custom_call.1']
    #allocation5 [shape = 'u8[24576]{0}', space=vmem, size = 0x6000, scoped, tag = 'output window, operand 0, single buffered']
    %6 = vsyncpa [#allocation3], 0
    %7 = vsyncpa [#allocation4], 0
    // Predicated region
    $region2: #{tpu_custom_call.1} parent=1 // pred_check
      _
    $region3: #{tpu_custom_call.1} parent=1 // pred_check_branch
      %9 = sbr.rel (0) target = $region5
    $region4: #{tpu_custom_call.1} parent=1 // pred_region
      %11 = vsyncadd [#allocation3], 0
      %s12 = sshll.u32 %s0, 4
      %s13 = int_to_ptr.hbm [resolvable:$true] %s12
      %s14 = sshll.u32 [#allocation2], 4
      %s15 = int_to_ptr.vmem [resolvable:$true] %s14
      %20 = dma.hbm_to_vmem [thread:$0]  %s13, 6912, %s15, [#allocation3], 128, 128, 8
    $region5: #{tpu_custom_call.1} parent=1 // pred_fallthru
      _
    // Predicated region
    $region6: #{tpu_custom_call.1} parent=1 // pred_check
      _
    $region7: #{tpu_custom_call.1} parent=1 // pred_check_branch
      %22 = sbr.rel (0) target = $region9
    $region8: #{tpu_custom_call.1} parent=1 // pred_region
      %24 = dma.done [#allocation3], 6912
    $region9: #{tpu_custom_call.1} parent=1 // pred_fallthru
      _
    %v25 = vld [vmem:[#allocation2] sm:$0x3f]
    %v26 = vld [vmem:[#allocation2 + $0x48] sm:$0x3f]
    %v27 = vld [vmem:[#allocation2 + $0x90] sm:$0x3f]
    %v28 = vld [vmem:[#allocation2 + $0xd8] sm:$0x3f]
    %v29 = vld [vmem:[#allocation2 + $0x120] sm:$0x3f]
    %v30 = vld [vmem:[#allocation2 + $0x168] sm:$0x3f]
    %s31 = scalar_lea.vmem [#allocation2], 8
    %v32 = vld [vmem:[%s31] sm:$0x3f]
    %v33 = vld [vmem:[%s31 + $0x48] sm:$0x3f]
    %v34 = vld [vmem:[%s31 + $0x90] sm:$0x3f]
    %v35 = vld [vmem:[%s31 + $0xd8] sm:$0x3f]
    %v36 = vld [vmem:[%s31 + $0x120] sm:$0x3f]
    %v37 = vld [vmem:[%s31 + $0x168] sm:$0x3f]
    %v38 = vmax.f32 %v25, %v32
    %v39 = vmax.f32 %v26, %v33
    %v40 = vmax.f32 %v27, %v34
    %v41 = vmax.f32 %v28, %v35
    %v42 = vmax.f32 %v29, %v36
    %v43 = vmax.f32 %v30, %v37
    %s44 = scalar_lea.vmem [#allocation2], 16
    %v45 = vld [vmem:[%s44] sm:$0x3f]
    %v46 = vld [vmem:[%s44 + $0x48] sm:$0x3f]
    %v47 = vld [vmem:[%s44 + $0x90] sm:$0x3f]
    %v48 = vld [vmem:[%s44 + $0xd8] sm:$0x3f]
    %v49 = vld [vmem:[%s44 + $0x120] sm:$0x3f]
    %v50 = vld [vmem:[%s44 + $0x168] sm:$0x3f]
    %v51 = vmax.f32 %v38, %v45
    %v52 = vmax.f32 %v39, %v46
    %v53 = vmax.f32 %v40, %v47
    %v54 = vmax.f32 %v41, %v48
    %v55 = vmax.f32 %v42, %v49
    %v56 = vmax.f32 %v43, %v50
    %s57 = scalar_lea.vmem [#allocation2], 24
    %v58 = vld [vmem:[%s57] sm:$0x3f]
    %v59 = vld [vmem:[%s57 + $0x48] sm:$0x3f]
    %v60 = vld [vmem:[%s57 + $0x90] sm:$0x3f]
    %v61 = vld [vmem:[%s57 + $0xd8] sm:$0x3f]
    %v62 = vld [vmem:[%s57 + $0x120] sm:$0x3f]
    %v63 = vld [vmem:[%s57 + $0x168] sm:$0x3f]
    %v64 = vmax.f32 %v51, %v58
    %v65 = vmax.f32 %v52, %v59
    %v66 = vmax.f32 %v53, %v60
    %v67 = vmax.f32 %v54, %v61
    %v68 = vmax.f32 %v55, %v62
    %v69 = vmax.f32 %v56, %v63
    %s70 = scalar_lea.vmem [#allocation2], 32
    %v71 = vld [vmem:[%s70] sm:$0x3f]
    %v72 = vld [vmem:[%s70 + $0x48] sm:$0x3f]
    %v73 = vld [vmem:[%s70 + $0x90] sm:$0x3f]
    %v74 = vld [vmem:[%s70 + $0xd8] sm:$0x3f]
    %v75 = vld [vmem:[%s70 + $0x120] sm:$0x3f]
    %v76 = vld [vmem:[%s70 + $0x168] sm:$0x3f]
    %v77 = vmax.f32 %v64, %v71
    %v78 = vmax.f32 %v65, %v72
    %v79 = vmax.f32 %v66, %v73
    %v80 = vmax.f32 %v67, %v74
    %v81 = vmax.f32 %v68, %v75
    %v82 = vmax.f32 %v69, %v76
    %s83 = scalar_lea.vmem [#allocation2], 40
    %v84 = vld [vmem:[%s83] sm:$0x3f]
    %v85 = vld [vmem:[%s83 + $0x48] sm:$0x3f]
    %v86 = vld [vmem:[%s83 + $0x90] sm:$0x3f]
    %v87 = vld [vmem:[%s83 + $0xd8] sm:$0x3f]
    %v88 = vld [vmem:[%s83 + $0x120] sm:$0x3f]
    %v89 = vld [vmem:[%s83 + $0x168] sm:$0x3f]
    %v90 = vmax.f32 %v77, %v84
    %v91 = vmax.f32 %v78, %v85
    %v92 = vmax.f32 %v79, %v86
    %v93 = vmax.f32 %v80, %v87
    %v94 = vmax.f32 %v81, %v88
    %v95 = vmax.f32 %v82, %v89
    %s96 = scalar_lea.vmem [#allocation2], 48
    %v97 = vld [vmem:[%s96] sm:$0x3f]
    %v98 = vld [vmem:[%s96 + $0x48] sm:$0x3f]
    %v99 = vld [vmem:[%s96 + $0x90] sm:$0x3f]
    %v100 = vld [vmem:[%s96 + $0xd8] sm:$0x3f]
    %v101 = vld [vmem:[%s96 + $0x120] sm:$0x3f]
    %v102 = vld [vmem:[%s96 + $0x168] sm:$0x3f]
    %v103 = vmax.f32 %v90, %v97
    %v104 = vmax.f32 %v91, %v98
    %v105 = vmax.f32 %v92, %v99
    %v106 = vmax.f32 %v93, %v100
    %v107 = vmax.f32 %v94, %v101
    %v108 = vmax.f32 %v95, %v102
    %s109 = scalar_lea.vmem [#allocation2], 56
    %v110 = vld [vmem:[%s109] sm:$0x3f]
    %v111 = vld [vmem:[%s109 + $0x48] sm:$0x3f]
    %v112 = vld [vmem:[%s109 + $0x90] sm:$0x3f]
    %v113 = vld [vmem:[%s109 + $0xd8] sm:$0x3f]
    %v114 = vld [vmem:[%s109 + $0x120] sm:$0x3f]
    %v115 = vld [vmem:[%s109 + $0x168] sm:$0x3f]
    %v116 = vmax.f32 %v103, %v110
    %v117 = vmax.f32 %v104, %v111
    %v118 = vmax.f32 %v105, %v112
    %v119 = vmax.f32 %v106, %v113
    %v120 = vmax.f32 %v107, %v114
    %v121 = vmax.f32 %v108, %v115
    %s122 = scalar_lea.vmem [#allocation2], 64
    %v123 = vld [vmem:[%s122] sm:$0x3f]
    %v124 = vld [vmem:[%s122 + $0x48] sm:$0x3f]
    %v125 = vld [vmem:[%s122 + $0x90] sm:$0x3f]
    %v126 = vld [vmem:[%s122 + $0xd8] sm:$0x3f]
    %v127 = vld [vmem:[%s122 + $0x120] sm:$0x3f]
    %v128 = vld [vmem:[%s122 + $0x168] sm:$0x3f]
    %v129 = vmax.f32 %v116, %v123
    %v130 = vmax.f32 %v117, %v124
    %v131 = vmax.f32 %v118, %v125
    %v132 = vmax.f32 %v119, %v126
    %v133 = vmax.f32 %v120, %v127
    %v134 = vmax.f32 %v121, %v128
    %vm135 = vcmask 62464
    %136 = vst.msk [vmem:[#allocation5] sm:$0x3f] %vm135, %v129
    %137 = vst.msk [vmem:[#allocation5 + $0x8] sm:$0x3f] %vm135, %v130
    %138 = vst.msk [vmem:[#allocation5 + $0x10] sm:$0x3f] %vm135, %v131
    %139 = vst.msk [vmem:[#allocation5 + $0x18] sm:$0x3f] %vm135, %v132
    %140 = vst.msk [vmem:[#allocation5 + $0x20] sm:$0x3f] %vm135, %v133
    %141 = vst.msk [vmem:[#allocation5 + $0x28] sm:$0x3f] %vm135, %v134
    // Predicated region
    $region10: #{tpu_custom_call.1} parent=1 // pred_check
      _
    $region11: #{tpu_custom_call.1} parent=1 // pred_check_branch
      %143 = sbr.rel (0) target = $region13
    $region12: #{tpu_custom_call.1} parent=1 // pred_region
      %145 = vsyncadd [#allocation4], 0
      %s146 = sshll.u32 [#allocation5], 4
      %s147 = int_to_ptr.vmem [resolvable:$true] %s146
      %s148 = sshll.u32 %s1, 4
      %s149 = int_to_ptr.hbm [resolvable:$true] %s148
      %154 = dma.vmem_to_hbm [thread:$0]  %s147, 768, %s149, [#allocation4], 128, 128, 8
    $region13: #{tpu_custom_call.1} parent=1 // pred_fallthru
      _
    // Predicated region
    $region14: #{tpu_custom_call.1} parent=1 // pred_check
      _
    $region15: #{tpu_custom_call.1} parent=1 // pred_check_branch
      %156 = sbr.rel (0) target = $region17
    $region16: #{tpu_custom_call.1} parent=1 // pred_region
      %158 = dma.done [#allocation4], 768
    $region17: #{tpu_custom_call.1} parent=1 // pred_fallthru
      _
    %159 = vsyncpa [#allocation3], 1
    %160 = vsyncpa [#allocation4], 1

</llo_original>
